<compile_context>
chip_gen: v7x
topology: tpu7x:2x2x1
jax: 0.10.0
libtpu: 0.0.40
codegen_flags: <defaults>
</compile_context>

<pallas_src>
import functools
import math

import jax
import jax.numpy as jnp
from jax import lax
from jax.experimental import pallas as pl
from jax.experimental.pallas import tpu as pltpu


def _sdpa_kernel(q_ref, k_ref, v_ref, out_ref, attn_ref, *, scale, mm_dtype):
    # q_ref: (TQ, E); k_ref/v_ref: (K, E); out_ref: (TQ, E); attn_ref: (TQ, K)

    # Fold 1/sqrt(d_head) into q: touches TQ*E elements instead of TQ*K, and
    # cast the matmul operands to the MXU-native dtype (bf16 for f32 inputs).
    q_mm = (q_ref[...] * scale).astype(mm_dtype)
    k_mm = k_ref[...].astype(mm_dtype)
    v_mm = v_ref[...].astype(mm_dtype)

    # scores = q @ k^T without materializing a transpose (contract E with E),
    # accumulated in f32 on the MXU.
    scores = lax.dot_general(
        q_mm, k_mm, dimension_numbers=(((1,), (1,)), ((), ())),
        preferred_element_type=jnp.float32)

    # Numerically stable softmax statistics over the key axis (f32).
    m = jnp.max(scores, axis=-1, keepdims=True)
    p = jnp.exp(scores - m)
    denom = jnp.sum(p, axis=-1, keepdims=True)

    # Deferred normalization: feed un-normalized p into the second matmul so
    # the MXU does not wait on the reciprocal / (TQ,K) normalize chain.
    out_unnorm = lax.dot_general(
        p.astype(mm_dtype), v_mm, dimension_numbers=(((1,), (0,)), ((), ())),
        preferred_element_type=jnp.float32)

    # Exact reciprocal on the tiny (TQ,1) vector: attention_score rows sum to 1
    # (PyTorch softmax parity).  The (TQ,K) normalize + downcast overlaps with
    # the matmul above.
    recip = 1.0 / denom
    attn_ref[...] = (p * recip).astype(attn_ref.dtype)
    # weighted_value rescale happens on the small (TQ,E) tile instead of (TQ,K).
    out_ref[...] = (out_unnorm * recip).astype(out_ref.dtype)


def _vmem_capacity_bytes():
    """Physical VMEM per TensorCore; conservative (v7x) fallback if unknown."""
    try:
        return int(pltpu.get_tpu_info().vmem_capacity_bytes)
    except Exception:
        return 64 * 1024 * 1024


def _choose_q_tile(Q, K, E, itemsize, budget_bytes):
    """Largest TQ (multiple of 8 dividing Q, or Q itself) whose per-step VMEM
    footprint — BlockSpec buffers AND in-kernel f32 temporaries — fits budget."""

    def per_step(tq):
        blockspec_bytes = itemsize * (
            2 * tq * E      # q tile (double-buffered)
            + 2 * tq * E    # weighted_value tile (double-buffered)
            + 2 * tq * K    # attention_score tile (double-buffered)
            + 2 * K * E     # K + V, single-buffered (pl.Buffered(1))
        )
        # Live f32 temporaries inside the kernel: scores / p / normalized attn
        # (~3 x (TQ,K)) plus the f32 out accumulator and scaled q (~2 x (TQ,E)).
        temp_bytes = 4 * (3 * tq * K + 2 * tq * E)
        return blockspec_bytes + temp_bytes

    if Q % 8 != 0:
        return Q  # full-extent block along Q is always legal
    candidates = [tq for tq in (2048, 1024, 512, 256, 128, 64, 32, 16, 8)
                  if tq <= Q and Q % tq == 0]
    if not candidates:
        return Q
    for tq in candidates:
        if per_step(tq) <= budget_bytes:
            return tq
    # TODO(synk): long-K shapes need a K-tiled path; until then fall back to the
    # smallest Q tile (full K/V residency is required to return attention_score
    # with an exact one-pass softmax).
    return candidates[-1]


def scaled_dot_product_attention(query, key, value, use_bf16_matmul=True):
    """query: [B,H,Q,E], key/value: [B,H,K,E]
    -> (weighted_value [B,H,Q,E], attention_score [B,H,Q,K])."""
    B, H, Q, E = query.shape
    _, _, K, _ = key.shape
    scale = 1.0 / math.sqrt(E)

    BH = B * H
    q3 = query.reshape(BH, Q, E)
    k3 = key.reshape(BH, K, E)
    v3 = value.reshape(BH, K, E)

    itemsize = jnp.dtype(query.dtype).itemsize
    cap = _vmem_capacity_bytes()
    tile_budget = cap // 3
    vmem_limit = max(32 * 1024 * 1024,
                     min(cap - 24 * 1024 * 1024, 96 * 1024 * 1024))

    TQ = _choose_q_tile(Q, K, E, itemsize, tile_budget)
    num_q_tiles = Q // TQ if Q % TQ == 0 else 1

    # bf16 MXU operands for f32 inputs (f32 accumulation preserved).
    if use_bf16_matmul and query.dtype == jnp.float32:
        mm_dtype = jnp.bfloat16
    else:
        mm_dtype = query.dtype

    kernel = functools.partial(_sdpa_kernel, scale=scale, mm_dtype=mm_dtype)

    out_shapes = (
        jax.ShapeDtypeStruct((BH, Q, E), query.dtype),  # weighted_value
        # NOTE: emitting this in bf16 would halve the dominant HBM writeback on
        # memory-bound shapes; kept at the input dtype for module parity.
        jax.ShapeDtypeStruct((BH, Q, K), query.dtype),  # attention_score
    )

    flops = 4 * BH * Q * K * E  # two matmuls of 2*Q*K*E each
    bytes_accessed = itemsize * (
        BH * Q * E          # query
        + 2 * BH * K * E    # key + value
        + BH * Q * E        # weighted_value out
        + BH * Q * K        # attention_score out (dominant at long S)
    )
    cost = pl.CostEstimate(flops=flops, transcendentals=BH * Q * K,
                           bytes_accessed=bytes_accessed)

    def build_call(kv_pipeline_mode):
        kv_kwargs = ({} if kv_pipeline_mode is None
                     else {"pipeline_mode": kv_pipeline_mode})
        grid_spec = pltpu.PrefetchScalarGridSpec(
            num_scalar_prefetch=0,
            grid=(BH, num_q_tiles),
            in_specs=[
                pl.BlockSpec((pl.Squeezed(), TQ, E), lambda bh, qi: (bh, qi, 0)),
                # K/V: constant block index across the inner qi axis ->
                # single-buffer to halve their fixed VMEM cost.
                pl.BlockSpec((pl.Squeezed(), K, E), lambda bh, qi: (bh, 0, 0),
                             **kv_kwargs),
                pl.BlockSpec((pl.Squeezed(), K, E), lambda bh, qi: (bh, 0, 0),
                             **kv_kwargs),
            ],
            out_specs=[
                pl.BlockSpec((pl.Squeezed(), TQ, E), lambda bh, qi: (bh, qi, 0)),
                pl.BlockSpec((pl.Squeezed(), TQ, K), lambda bh, qi: (bh, qi, 0)),
            ],
        )
        return pl.pallas_call(
            kernel,
            out_shape=out_shapes,
            grid_spec=grid_spec,
            compiler_params=pltpu.CompilerParams(
                dimension_semantics=("parallel", "parallel"),
                vmem_limit_bytes=vmem_limit,
            ),
            cost_estimate=cost,
        )

    try:
        out3, attn3 = build_call(pl.Buffered(1))(q3, k3, v3)
    except Exception:
        # Fallback for environments where Buffered(1) on a pallas_call BlockSpec
        # is rejected: default double-buffering (costs a little extra VMEM only).
        out3, attn3 = build_call(None)(q3, k3, v3)

    return out3.reshape(B, H, Q, E), attn3.reshape(B, H, Q, K)


def _reference(query, key, value):
    E = query.shape[-1]
    scores = jnp.einsum("bhqe,bhke->bhqk", query, key) / math.sqrt(E)
    attn = jax.nn.softmax(scores, axis=-1)
    out = jnp.einsum("bhqk,bhke->bhqe", attn, value)
    return out, attn


if __name__ == "__main__":
    # Small, deterministic inputs: batch=2, heads=4, seq=8, d_head=32.
    B, H, S, D = 2, 4, 8, 32
    key_rng = jax.random.PRNGKey(0)
    kq, kk, kv = jax.random.split(key_rng, 3)
    q = jax.random.normal(kq, (B, H, S, D), dtype=jnp.float32)
    k = jax.random.normal(kk, (B, H, S, D), dtype=jnp.float32)
    v = jax.random.normal(kv, (B, H, S, D), dtype=jnp.float32)

    weighted_value, attention_score = scaled_dot_product_attention(q, k, v)
    jax.block_until_ready((weighted_value, attention_score))

    ref_out, ref_attn = _reference(q, k, v)
    assert weighted_value.shape == (B, H, S, D)
    assert attention_score.shape == (B, H, S, S)
    # Tolerances account for bf16 MXU operands (f32 accumulation kept).
    assert jnp.allclose(weighted_value, ref_out, atol=2e-2, rtol=2e-2)
    assert jnp.allclose(attention_score, ref_attn, atol=2e-2, rtol=2e-2)
    # Exact-reciprocal normalization: rows of the attention matrix sum to ~1.
    assert jnp.allclose(attention_score.sum(-1), 1.0, atol=1e-3)

    print("KERNEL_OK")
</pallas_src>

<mosaic_0001>
module attributes {stable_mosaic.version = 11 : i64} {
  func.func @_sdpa_kernel(%arg0: i32, %arg1: i32, %arg2: memref<1x8x32xf32, #tpu.memory_space<vmem>>, %arg3: memref<1x8x32xf32, #tpu.memory_space<vmem>>, %arg4: memref<1x8x32xf32, #tpu.memory_space<vmem>>, %arg5: memref<1x8x32xf32, #tpu.memory_space<vmem>>, %arg6: memref<1x8x8xf32, #tpu.memory_space<vmem>>) attributes {dimension_semantics = [#tpu.dimension_semantics<parallel>, #tpu.dimension_semantics<parallel>], iteration_bounds = array<i64: 8, 1>, scalar_prefetch = 0 : i64, scratch_operands = 0 : i64, tpu.core_type = #tpu.core_type<tc>, window_params = [{transform_indices = @transform_0, window_bounds = array<i64: 1, 8, 32>}, {pipeline_mode = #tpu.pipeline_mode<synchronous>, transform_indices = @transform_1, window_bounds = array<i64: 1, 8, 32>}, {pipeline_mode = #tpu.pipeline_mode<synchronous>, transform_indices = @transform_2, window_bounds = array<i64: 1, 8, 32>}, {transform_indices = @transform_3, window_bounds = array<i64: 1, 8, 32>}, {transform_indices = @transform_4, window_bounds = array<i64: 1, 8, 8>}]} {
    %c0 = arith.constant 0 : index
    %c0_0 = arith.constant 0 : index
    %c0_1 = arith.constant 0 : index
    %0 = vector.load %arg2[%c0, %c0_0, %c0_1] : memref<1x8x32xf32, #tpu.memory_space<vmem>>, vector<1x8x32xf32>
    %1 = vector.shape_cast %0 : vector<1x8x32xf32> to vector<8x32xf32>
    %cst = arith.constant 0.176776692 : f32
    %2 = vector.broadcast %cst : f32 to vector<8x32xf32>
    %3 = arith.mulf %1, %2 : vector<8x32xf32>
    %4 = arith.truncf %3 : vector<8x32xf32> to vector<8x32xbf16>
    %c0_2 = arith.constant 0 : index
    %c0_3 = arith.constant 0 : index
    %c0_4 = arith.constant 0 : index
    %5 = vector.load %arg3[%c0_2, %c0_3, %c0_4] : memref<1x8x32xf32, #tpu.memory_space<vmem>>, vector<1x8x32xf32>
    %6 = vector.shape_cast %5 : vector<1x8x32xf32> to vector<8x32xf32>
    %7 = arith.truncf %6 : vector<8x32xf32> to vector<8x32xbf16>
    %c0_5 = arith.constant 0 : index
    %c0_6 = arith.constant 0 : index
    %c0_7 = arith.constant 0 : index
    %8 = vector.load %arg4[%c0_5, %c0_6, %c0_7] : memref<1x8x32xf32, #tpu.memory_space<vmem>>, vector<1x8x32xf32>
    %9 = vector.shape_cast %8 : vector<1x8x32xf32> to vector<8x32xf32>
    %10 = arith.truncf %9 : vector<8x32xf32> to vector<8x32xbf16>
    %cst_8 = arith.constant dense<0.000000e+00> : vector<8x8xf32>
    %11 = tpu.matmul %4, %7, %cst_8 {dimension_numbers = #tpu.dot_dimension_numbers<[1], [1], [0], [0], [0, 0, 1, 0], [], []>} : vector<8x32xbf16>, vector<8x32xbf16>, vector<8x8xf32> -> vector<8x8xf32>
    %cst_9 = arith.constant dense<0xFF800000> : vector<8xf32>
    %12 = vector.multi_reduction <maximumf>, %11, %cst_9 [1] : vector<8x8xf32> to vector<8xf32>
    %13 = vector.shape_cast %12 : vector<8xf32> to vector<8x1xf32>
    %14 = vector.broadcast %13 : vector<8x1xf32> to vector<8x8xf32>
    %15 = arith.subf %11, %14 : vector<8x8xf32>
    %16 = math.exp %15 : vector<8x8xf32>
    %cst_10 = arith.constant dense<0.000000e+00> : vector<8xf32>
    %17 = vector.multi_reduction <add>, %16, %cst_10 [1] : vector<8x8xf32> to vector<8xf32>
    %18 = vector.shape_cast %17 : vector<8xf32> to vector<8x1xf32>
    %19 = arith.truncf %16 : vector<8x8xf32> to vector<8x8xbf16>
    %cst_11 = arith.constant dense<0.000000e+00> : vector<8x32xf32>
    %20 = tpu.matmul %19, %10, %cst_11 {dimension_numbers = #tpu.dot_dimension_numbers<[1], [0], [0], [1], [0, 0, 1, 1], [], []>} : vector<8x8xbf16>, vector<8x32xbf16>, vector<8x32xf32> -> vector<8x32xf32>
    %cst_12 = arith.constant 1.000000e+00 : f32
    %21 = vector.broadcast %cst_12 : f32 to vector<8x1xf32>
    %22 = arith.divf %21, %18 : vector<8x1xf32>
    %23 = vector.broadcast %22 : vector<8x1xf32> to vector<8x8xf32>
    %24 = arith.mulf %16, %23 : vector<8x8xf32>
    %c0_13 = arith.constant 0 : index
    %c0_14 = arith.constant 0 : index
    %c0_15 = arith.constant 0 : index
    %25 = vector.load %arg6[%c0_13, %c0_14, %c0_15] : memref<1x8x8xf32, #tpu.memory_space<vmem>>, vector<1x8x8xf32>
    %26 = vector.shape_cast %25 : vector<1x8x8xf32> to vector<8x8xf32>
    %27 = vector.shape_cast %24 : vector<8x8xf32> to vector<1x8x8xf32>
    tpu.vector_store %arg6[%c0_13, %c0_14, %c0_15], %27 {strides = array<i32>} : memref<1x8x8xf32, #tpu.memory_space<vmem>>, vector<1x8x8xf32>,
    %28 = vector.broadcast %22 : vector<8x1xf32> to vector<8x32xf32>
    %29 = arith.mulf %20, %28 : vector<8x32xf32>
    %c0_16 = arith.constant 0 : index
    %c0_17 = arith.constant 0 : index
    %c0_18 = arith.constant 0 : index
    %30 = vector.load %arg5[%c0_16, %c0_17, %c0_18] : memref<1x8x32xf32, #tpu.memory_space<vmem>>, vector<1x8x32xf32>
    %31 = vector.shape_cast %30 : vector<1x8x32xf32> to vector<8x32xf32>
    %32 = vector.shape_cast %29 : vector<8x32xf32> to vector<1x8x32xf32>
    tpu.vector_store %arg5[%c0_16, %c0_17, %c0_18], %32 {strides = array<i32>} : memref<1x8x32xf32, #tpu.memory_space<vmem>>, vector<1x8x32xf32>,
    return
  }
  func.func @transform_0(%arg0: i32, %arg1: i32) -> (i32, i32, i32) {
    %c0_i32 = arith.constant 0 : i32
    %c0_i32_0 = arith.constant 0 : i32
    return %arg0, %arg1, %c0_i32 : i32, i32, i32
  }
  func.func @transform_1(%arg0: i32, %arg1: i32) -> (i32, i32, i32) {
    %c0_i32 = arith.constant 0 : i32
    %c0_i32_0 = arith.constant 0 : i32
    %c0_i32_1 = arith.constant 0 : i32
    return %arg0, %c0_i32, %c0_i32_0 : i32, i32, i32
  }
  func.func @transform_2(%arg0: i32, %arg1: i32) -> (i32, i32, i32) {
    %c0_i32 = arith.constant 0 : i32
    %c0_i32_0 = arith.constant 0 : i32
    %c0_i32_1 = arith.constant 0 : i32
    return %arg0, %c0_i32, %c0_i32_0 : i32, i32, i32
  }
  func.func @transform_3(%arg0: i32, %arg1: i32) -> (i32, i32, i32) {
    %c0_i32 = arith.constant 0 : i32
    %c0_i32_0 = arith.constant 0 : i32
    return %arg0, %arg1, %c0_i32 : i32, i32, i32
  }
  func.func @transform_4(%arg0: i32, %arg1: i32) -> (i32, i32, i32) {
    %c0_i32 = arith.constant 0 : i32
    %c0_i32_0 = arith.constant 0 : i32
    return %arg0, %arg1, %c0_i32 : i32, i32, i32
  }
}

module attributes {stable_mosaic.version = 11 : i64} {
  func.func @_sdpa_kernel(%arg0: i32, %arg1: i32, %arg2: memref<1x8x32xf32, #tpu.memory_space<vmem>>, %arg3: memref<1x8x32xf32, #tpu.memory_space<vmem>>, %arg4: memref<1x8x32xf32, #tpu.memory_space<vmem>>, %arg5: memref<1x8x32xf32, #tpu.memory_space<vmem>>, %arg6: memref<1x8x8xf32, #tpu.memory_space<vmem>>) attributes {dimension_semantics = [#tpu.dimension_semantics<parallel>, #tpu.dimension_semantics<parallel>], iteration_bounds = array<i64: 8, 1>, scalar_prefetch = 0 : i64, scratch_operands = 0 : i64, tpu.core_type = #tpu.core_type<tc>, window_params = [{transform_indices = @transform_0, window_bounds = array<i64: 1, 8, 32>}, {transform_indices = @transform_1, window_bounds = array<i64: 1, 8, 32>}, {transform_indices = @transform_2, window_bounds = array<i64: 1, 8, 32>}, {transform_indices = @transform_3, window_bounds = array<i64: 1, 8, 32>}, {transform_indices = @transform_4, window_bounds = array<i64: 1, 8, 8>}]} {
    %c0 = arith.constant 0 : index
    %c0_0 = arith.constant 0 : index
    %c0_1 = arith.constant 0 : index
    %0 = vector.load %arg2[%c0, %c0_0, %c0_1] : memref<1x8x32xf32, #tpu.memory_space<vmem>>, vector<1x8x32xf32>
    %1 = vector.shape_cast %0 : vector<1x8x32xf32> to vector<8x32xf32>
    %cst = arith.constant 0.176776692 : f32
    %2 = vector.broadcast %cst : f32 to vector<8x32xf32>
    %3 = arith.mulf %1, %2 : vector<8x32xf32>
    %4 = arith.truncf %3 : vector<8x32xf32> to vector<8x32xbf16>
    %c0_2 = arith.constant 0 : index
    %c0_3 = arith.constant 0 : index
    %c0_4 = arith.constant 0 : index
    %5 = vector.load %arg3[%c0_2, %c0_3, %c0_4] : memref<1x8x32xf32, #tpu.memory_space<vmem>>, vector<1x8x32xf32>
    %6 = vector.shape_cast %5 : vector<1x8x32xf32> to vector<8x32xf32>
    %7 = arith.truncf %6 : vector<8x32xf32> to vector<8x32xbf16>
    %c0_5 = arith.constant 0 : index
    %c0_6 = arith.constant 0 : index
    %c0_7 = arith.constant 0 : index
    %8 = vector.load %arg4[%c0_5, %c0_6, %c0_7] : memref<1x8x32xf32, #tpu.memory_space<vmem>>, vector<1x8x32xf32>
    %9 = vector.shape_cast %8 : vector<1x8x32xf32> to vector<8x32xf32>
    %10 = arith.truncf %9 : vector<8x32xf32> to vector<8x32xbf16>
    %cst_8 = arith.constant dense<0.000000e+00> : vector<8x8xf32>
    %11 = tpu.matmul %4, %7, %cst_8 {dimension_numbers = #tpu.dot_dimension_numbers<[1], [1], [0], [0], [0, 0, 1, 0], [], []>} : vector<8x32xbf16>, vector<8x32xbf16>, vector<8x8xf32> -> vector<8x8xf32>
    %cst_9 = arith.constant dense<0xFF800000> : vector<8xf32>
    %12 = vector.multi_reduction <maximumf>, %11, %cst_9 [1] : vector<8x8xf32> to vector<8xf32>
    %13 = vector.shape_cast %12 : vector<8xf32> to vector<8x1xf32>
    %14 = vector.broadcast %13 : vector<8x1xf32> to vector<8x8xf32>
    %15 = arith.subf %11, %14 : vector<8x8xf32>
    %16 = math.exp %15 : vector<8x8xf32>
    %cst_10 = arith.constant dense<0.000000e+00> : vector<8xf32>
    %17 = vector.multi_reduction <add>, %16, %cst_10 [1] : vector<8x8xf32> to vector<8xf32>
    %18 = vector.shape_cast %17 : vector<8xf32> to vector<8x1xf32>
    %19 = arith.truncf %16 : vector<8x8xf32> to vector<8x8xbf16>
    %cst_11 = arith.constant dense<0.000000e+00> : vector<8x32xf32>
    %20 = tpu.matmul %19, %10, %cst_11 {dimension_numbers = #tpu.dot_dimension_numbers<[1], [0], [0], [1], [0, 0, 1, 1], [], []>} : vector<8x8xbf16>, vector<8x32xbf16>, vector<8x32xf32> -> vector<8x32xf32>
    %cst_12 = arith.constant 1.000000e+00 : f32
    %21 = vector.broadcast %cst_12 : f32 to vector<8x1xf32>
    %22 = arith.divf %21, %18 : vector<8x1xf32>
    %23 = vector.broadcast %22 : vector<8x1xf32> to vector<8x8xf32>
    %24 = arith.mulf %16, %23 : vector<8x8xf32>
    %c0_13 = arith.constant 0 : index
    %c0_14 = arith.constant 0 : index
    %c0_15 = arith.constant 0 : index
    %25 = vector.load %arg6[%c0_13, %c0_14, %c0_15] : memref<1x8x8xf32, #tpu.memory_space<vmem>>, vector<1x8x8xf32>
    %26 = vector.shape_cast %25 : vector<1x8x8xf32> to vector<8x8xf32>
    %27 = vector.shape_cast %24 : vector<8x8xf32> to vector<1x8x8xf32>
    tpu.vector_store %arg6[%c0_13, %c0_14, %c0_15], %27 {strides = array<i32>} : memref<1x8x8xf32, #tpu.memory_space<vmem>>, vector<1x8x8xf32>,
    %28 = vector.broadcast %22 : vector<8x1xf32> to vector<8x32xf32>
    %29 = arith.mulf %20, %28 : vector<8x32xf32>
    %c0_16 = arith.constant 0 : index
    %c0_17 = arith.constant 0 : index
    %c0_18 = arith.constant 0 : index
    %30 = vector.load %arg5[%c0_16, %c0_17, %c0_18] : memref<1x8x32xf32, #tpu.memory_space<vmem>>, vector<1x8x32xf32>
    %31 = vector.shape_cast %30 : vector<1x8x32xf32> to vector<8x32xf32>
    %32 = vector.shape_cast %29 : vector<8x32xf32> to vector<1x8x32xf32>
    tpu.vector_store %arg5[%c0_16, %c0_17, %c0_18], %32 {strides = array<i32>} : memref<1x8x32xf32, #tpu.memory_space<vmem>>, vector<1x8x32xf32>,
    return
  }
  func.func @transform_0(%arg0: i32, %arg1: i32) -> (i32, i32, i32) {
    %c0_i32 = arith.constant 0 : i32
    %c0_i32_0 = arith.constant 0 : i32
    return %arg0, %arg1, %c0_i32 : i32, i32, i32
  }
  func.func @transform_1(%arg0: i32, %arg1: i32) -> (i32, i32, i32) {
    %c0_i32 = arith.constant 0 : i32
    %c0_i32_0 = arith.constant 0 : i32
    %c0_i32_1 = arith.constant 0 : i32
    return %arg0, %c0_i32, %c0_i32_0 : i32, i32, i32
  }
  func.func @transform_2(%arg0: i32, %arg1: i32) -> (i32, i32, i32) {
    %c0_i32 = arith.constant 0 : i32
    %c0_i32_0 = arith.constant 0 : i32
    %c0_i32_1 = arith.constant 0 : i32
    return %arg0, %c0_i32, %c0_i32_0 : i32, i32, i32
  }
  func.func @transform_3(%arg0: i32, %arg1: i32) -> (i32, i32, i32) {
    %c0_i32 = arith.constant 0 : i32
    %c0_i32_0 = arith.constant 0 : i32
    return %arg0, %arg1, %c0_i32 : i32, i32, i32
  }
  func.func @transform_4(%arg0: i32, %arg1: i32) -> (i32, i32, i32) {
    %c0_i32 = arith.constant 0 : i32
    %c0_i32_0 = arith.constant 0 : i32
    return %arg0, %arg1, %c0_i32 : i32, i32, i32
  }
}

</mosaic_0001>

<llo_original>
// kernel: tpu_custom_call.1
$region0: #{tpu_custom_call.1}
  #allocation0 [shape = 'u32[]', space=smem, size = 0x4, offset = 0x4, fixed_abs, tag = 'smem constant byte address 0x4 - core index']
  #allocation1 [shape = 'u32[144,128]{1,0:T(1,128)}', space=vmem, size = 0x12000, scoped, tag = 'internal scratch']
  %s0 = inlined_call_operand.hbm [shape: f32[8,8,32], index: 0, kind: input, shape index: {}]
  %s1 = inlined_call_operand.hbm [shape: f32[8,8,32], index: 1, kind: input, shape index: {}]
  %s2 = inlined_call_operand.hbm [shape: f32[8,8,32], index: 2, kind: input, shape index: {}]
  %s3 = inlined_call_operand.hbm [shape: f32[8,8,32], index: 3, kind: output, shape index: {0}]
  %s4 = inlined_call_operand.hbm [shape: f32[8,8,8], index: 4, kind: output, shape index: {1}]
  %5 = xla_tuple %s3, %s4
  %s6 = sld [smem:[#allocation0]]
  $region65: #{tpu_custom_call.1} parent=0
    _
  %s8 = ssub.s32 1, %s6
  %s9 = scalar_select 0, %s8, %s6
  $region1: #{tpu_custom_call.1} parent=0
    #allocation2 [shape = 'u8[8192]{0}', space=vmem, size = 0x2000, scoped, tag = 'input window, operand 0']
    #allocation3 [shape = 's32[2]{0}', space=sflag, size = 0x8, scoped, tag = 'scoped memory for tpu_custom_call.1']
    #allocation4 [shape = 's32[2]{0}', space=sflag, size = 0x8, scoped, tag = 'scoped memory for tpu_custom_call.1']
    #allocation5 [shape = 'u8[4096]{0}', space=vmem, size = 0x1000, scoped, tag = 'input window, operand 1, single buffered']
    #allocation6 [shape = 's32[1]{0}', space=sflag, size = 0x4, scoped, tag = 'scoped memory for tpu_custom_call.1']
    #allocation7 [shape = 'u8[4096]{0}', space=vmem, size = 0x1000, scoped, tag = 'input window, operand 2, single buffered']
    #allocation8 [shape = 'u8[8192]{0}', space=vmem, size = 0x2000, scoped, tag = 'output window, operand 0']
    #allocation9 [shape = 'u8[8192]{0}', space=vmem, size = 0x2000, scoped, tag = 'output window, operand 1']
    #allocation10 [shape = 's32[2]{0}', space=sflag, size = 0x8, scoped, tag = 'scoped memory for tpu_custom_call.1']
    %10 = vsyncpa [#allocation3], 0
    %s11 = scalar_lea.sflag [#allocation3], 1
    %12 = vsyncpa %s11, 0
    %13 = vsyncpa [#allocation6], 0
    %14 = vsyncpa [#allocation4], 0
    %s15 = scalar_lea.sflag [#allocation4], 1
    %16 = vsyncpa %s15, 0
    %17 = vsyncpa [#allocation10], 0
    %s18 = scalar_lea.sflag [#allocation10], 1
    %19 = vsyncpa %s18, 0
    loop: start=0, step=1, limit=10
    $region2: #{tpu_custom_call.1} parent=1 // loop_pre_header
      _
    $region3: #{tpu_custom_call.1} parent=1 // loop_header
      %s21 = sphi 0, %s25
      %p22 = scmp.ge.s32.totalorder %s21, 10
      %s28 = sphi 0, %s40
      %s29 = sphi 0, %s36
      %s30 = sphi 0, %s28
      %s31 = sphi 0, %s29
      %s32 = sphi 0, %s30
      %s33 = sphi 0, %s31
      %s45 = sphi 0, %s47
      %s48 = sphi 0, %s45
      %s49 = sphi 0, %s48
      %s65 = sphi 0, %s49
      %s71 = sphi 0, %s73
      %s74 = sphi 0, %s71
      %s75 = sphi 0, %s74
      %s91 = sphi 0, %s75
      %s97 = sphi 0, %s99
      %s100 = sphi 0, %s97
      %s101 = sphi 0, %s100
      %s117 = sphi 0, %s101
      %s125 = sphi 0, %s127
      %s128 = sphi 0, %s125
      %s129 = sphi 0, %s128
      %s145 = sphi 0, %s129
      %s153 = sphi 0, %s155
      %s156 = sphi 0, %s153
      %s157 = sphi 0, %s156
      %s173 = sphi 0, %s157
    $region4: #{tpu_custom_call.1} parent=1 // loop_header_branch
      %24 = sbr.rel (%p22) target = $region8
    $region5: #{tpu_custom_call.1} parent=1 // loop_body
      %s26 = ssub.s32 %s21, 1
      %s27 = ssub.s32 %s21, 2
      %s34 = sadd.s32 1, %s29
      %p35 = scmp.ge.s32.totalorder %s34, 1
      %s36 = scalar_select %p35, 0, %s34
      %s37 = sadd.s32 1, %s28
      %s38 = scalar_select %p35, %s37, %s28
      %p39 = scmp.ge.s32.totalorder %s38, 8
      %s40 = scalar_select %p39, 0, %s38
      %s41 = ssub.s32 %s28, %s40
      %s42 = ssub.s32 %s29, %s36
      %s43 = sor.u32 %s41, %s42
      %p44 = scmp.eq.s32.totalorder %s43, 0
      %s46 = sadd.s32 %s45, 1
      %s47 = scalar_select %p44, %s45, %s46
      %p50 = pneg %p44
      %p51 = scmp.eq.s32.totalorder %s21, 7
      %p52 = por %p50, %p51
      %p53 = scmp.ne.s32.totalorder %s45, %s48
      %p54 = scmp.eq.s32.totalorder %s21, 0
      %p55 = por %p53, %p54
      %p56 = scmp.ne.s32.totalorder %s45, %s48
      %p57 = scmp.eq.s32.totalorder %s26, 7
      %p58 = por %p56, %p57
      %p59 = scmp.ne.s32.totalorder %s48, %s49
      %p60 = scmp.eq.s32.totalorder %s26, 0
      %p61 = por %p59, %p60
      %p62 = scmp.ne.s32.totalorder %s48, %s49
      %p63 = scmp.eq.s32.totalorder %s27, 7
      %p64 = por %p62, %p63
      %p66 = scmp.ne.s32.totalorder %s49, %s65
      %p67 = scmp.eq.s32.totalorder %s27, 0
      %p68 = por %p66, %p67
      %s69 = ssub.s32 %s28, %s40
      %p70 = scmp.eq.s32.totalorder %s69, 0
      %s72 = sadd.s32 %s71, 1
      %s73 = scalar_select %p70, %s71, %s72
      %p76 = pneg %p70
      %p77 = scmp.eq.s32.totalorder %s21, 7
      %p78 = por %p76, %p77
      %p79 = scmp.ne.s32.totalorder %s71, %s74
      %p80 = scmp.eq.s32.totalorder %s21, 0
      %p81 = por %p79, %p80
      %p82 = scmp.ne.s32.totalorder %s71, %s74
      %p83 = scmp.eq.s32.totalorder %s26, 7
      %p84 = por %p82, %p83
      %p85 = scmp.ne.s32.totalorder %s74, %s75
      %p86 = scmp.eq.s32.totalorder %s26, 0
      %p87 = por %p85, %p86
      %p88 = scmp.ne.s32.totalorder %s74, %s75
      %p89 = scmp.eq.s32.totalorder %s27, 7
      %p90 = por %p88, %p89
      %p92 = scmp.ne.s32.totalorder %s75, %s91
      %p93 = scmp.eq.s32.totalorder %s27, 0
      %p94 = por %p92, %p93
      %s95 = ssub.s32 %s28, %s40
      %p96 = scmp.eq.s32.totalorder %s95, 0
      %s98 = sadd.s32 %s97, 1
      %s99 = scalar_select %p96, %s97, %s98
      %p102 = pneg %p96
      %p103 = scmp.eq.s32.totalorder %s21, 7
      %p104 = por %p102, %p103
      %p105 = scmp.ne.s32.totalorder %s97, %s100
      %p106 = scmp.eq.s32.totalorder %s21, 0
      %p107 = por %p105, %p106
      %p108 = scmp.ne.s32.totalorder %s97, %s100
      %p109 = scmp.eq.s32.totalorder %s26, 7
      %p110 = por %p108, %p109
      %p111 = scmp.ne.s32.totalorder %s100, %s101
      %p112 = scmp.eq.s32.totalorder %s26, 0
      %p113 = por %p111, %p112
      %p114 = scmp.ne.s32.totalorder %s100, %s101
      %p115 = scmp.eq.s32.totalorder %s27, 7
      %p116 = por %p114, %p115
      %p118 = scmp.ne.s32.totalorder %s101, %s117
      %p119 = scmp.eq.s32.totalorder %s27, 0
      %p120 = por %p118, %p119
      %s121 = ssub.s32 %s28, %s40
      %s122 = ssub.s32 %s29, %s36
      %s123 = sor.u32 %s121, %s122
      %p124 = scmp.eq.s32.totalorder %s123, 0
      %s126 = sadd.s32 %s125, 1
      %s127 = scalar_select %p124, %s125, %s126
      %p130 = pneg %p124
      %p131 = scmp.eq.s32.totalorder %s21, 7
      %p132 = por %p130, %p131
      %p133 = scmp.ne.s32.totalorder %s125, %s128
      %p134 = scmp.eq.s32.totalorder %s21, 0
      %p135 = por %p133, %p134
      %p136 = scmp.ne.s32.totalorder %s125, %s128
      %p137 = scmp.eq.s32.totalorder %s26, 7
      %p138 = por %p136, %p137
      %p139 = scmp.ne.s32.totalorder %s128, %s129
      %p140 = scmp.eq.s32.totalorder %s26, 0
      %p141 = por %p139, %p140
      %p142 = scmp.ne.s32.totalorder %s128, %s129
      %p143 = scmp.eq.s32.totalorder %s27, 7
      %p144 = por %p142, %p143
      %p146 = scmp.ne.s32.totalorder %s129, %s145
      %p147 = scmp.eq.s32.totalorder %s27, 0
      %p148 = por %p146, %p147
      %s149 = ssub.s32 %s28, %s40
      %s150 = ssub.s32 %s29, %s36
      %s151 = sor.u32 %s149, %s150
      %p152 = scmp.eq.s32.totalorder %s151, 0
      %s154 = sadd.s32 %s153, 1
      %s155 = scalar_select %p152, %s153, %s154
      %p158 = pneg %p152
      %p159 = scmp.eq.s32.totalorder %s21, 7
      %p160 = por %p158, %p159
      %p161 = scmp.ne.s32.totalorder %s153, %s156
      %p162 = scmp.eq.s32.totalorder %s21, 0
      %p163 = por %p161, %p162
      %p164 = scmp.ne.s32.totalorder %s153, %s156
      %p165 = scmp.eq.s32.totalorder %s26, 7
      %p166 = por %p164, %p165
      %p167 = scmp.ne.s32.totalorder %s156, %s157
      %p168 = scmp.eq.s32.totalorder %s26, 0
      %p169 = por %p167, %p168
      %p170 = scmp.ne.s32.totalorder %s156, %s157
      %p171 = scmp.eq.s32.totalorder %s27, 7
      %p172 = por %p170, %p171
      %p174 = scmp.ne.s32.totalorder %s157, %s173
      %p175 = scmp.eq.s32.totalorder %s27, 0
      %p176 = por %p174, %p175
      %p177 = scmp.le.s32.totalorder 1, %s21
      %p178 = scmp.lt.s32.totalorder %s21, 9
      %p179 = pnand %p177, %p178
      %p180 = pneg %p179
      // Predicated region
      $region9: #{tpu_custom_call.1} parent=5 // pred_check
        _
      $region10: #{tpu_custom_call.1} parent=5 // pred_check_branch
        %182 = sbr.rel (%p179) target = $region12
      $region11: #{tpu_custom_call.1} parent=5 // pred_region
        %s183 = ssub.s32 %s21, 1
        // Predicated region
        $region13: #{tpu_custom_call.1} parent=11 // pred_check
          %p184 = pneg %p87
        $region14: #{tpu_custom_call.1} parent=11 // pred_check_branch
          %186 = sbr.rel (%p184) target = $region16
        $region15: #{tpu_custom_call.1} parent=11 // pred_region
          %s188 = ssub.s32 128, 128
          %189 = vsyncadd [#allocation6], %s188
          %s190 = smul.addr %s30, 128
          %s191 = scalar_lea.hbm %s1, %s190
          %s193 = sshll.u32 [#allocation5], 4
          %s194 = int_to_ptr.vmem [resolvable:$true] %s193
          %196 = dma.hbm_to_vmem [thread:$0]  %s191, 128, %s194, [#allocation6]
        $region16: #{tpu_custom_call.1} parent=11 // pred_fallthru
          _
        // Predicated region
        $region17: #{tpu_custom_call.1} parent=11 // pred_check
          %p197 = pneg %p113
        $region18: #{tpu_custom_call.1} parent=11 // pred_check_branch
          %199 = sbr.rel (%p197) target = $region20
        $region19: #{tpu_custom_call.1} parent=11 // pred_region
          %s201 = ssub.s32 128, 128
          %202 = vsyncadd [#allocation6], %s201
          %s203 = smul.addr %s30, 128
          %s204 = scalar_lea.hbm %s2, %s203
          %s206 = sshll.u32 [#allocation7], 4
          %s207 = int_to_ptr.vmem [resolvable:$true] %s206
          %209 = dma.hbm_to_vmem [thread:$0]  %s204, 128, %s207, [#allocation6]
        $region20: #{tpu_custom_call.1} parent=11 // pred_fallthru
          _
      $region12: #{tpu_custom_call.1} parent=5 // pred_fallthru
        _
      %p210 = scmp.lt.s32.totalorder %s21, 8
      // Predicated region
      $region21: #{tpu_custom_call.1} parent=5 // pred_check
        %p211 = pneg %p210
      $region22: #{tpu_custom_call.1} parent=5 // pred_check_branch
        %213 = sbr.rel (%p211) target = $region24
      $region23: #{tpu_custom_call.1} parent=5 // pred_region
        // Predicated region
        $region25: #{tpu_custom_call.1} parent=23 // pred_check
          %p214 = pneg %p55
        $region26: #{tpu_custom_call.1} parent=23 // pred_check_branch
          %216 = sbr.rel (%p214) target = $region28
        $region27: #{tpu_custom_call.1} parent=23 // pred_region
          %s217 = sand.u32 %s45, 1
          %s218 = scalar_lea.sflag [#allocation3], %s217
          %s219 = sand.u32 %s45, 1
          %s220 = smul.addr %s219, 8
          %s221 = scalar_lea.vmem [#allocation2], %s220
          %s223 = ssub.s32 128, 128
          %224 = vsyncadd %s218, %s223
          %s225 = sadd.s32 %s29, %s28
          %s226 = smul.addr %s225, 128
          %s227 = scalar_lea.hbm %s0, %s226
          %s229 = sshll.u32 %s221, 4
          %s230 = int_to_ptr.vmem [resolvable:$true] %s229
          %232 = dma.hbm_to_vmem [thread:$0]  %s227, 128, %s230, %s218
        $region28: #{tpu_custom_call.1} parent=23 // pred_fallthru
          _
      $region24: #{tpu_custom_call.1} parent=5 // pred_fallthru
        _
      %p233 = scmp.le.s32.totalorder 1, %s21
      %p234 = scmp.lt.s32.totalorder %s21, 9
      %p235 = pnand %p233, %p234
      %p236 = pneg %p235
      // Predicated region
      $region29: #{tpu_custom_call.1} parent=5 // pred_check
        _
      $region30: #{tpu_custom_call.1} parent=5 // pred_check_branch
        %238 = sbr.rel (%p235) target = $region32
      $region31: #{tpu_custom_call.1} parent=5 // pred_region
        %s239 = ssub.s32 %s21, 1
        %s240 = sand.u32 %s48, 1
        %s241 = scalar_lea.sflag [#allocation3], %s240
        %s242 = sand.u32 %s48, 1
        %s243 = smul.addr %s242, 8
        %s244 = scalar_lea.vmem [#allocation2], %s243
        // Predicated region
        $region33: #{tpu_custom_call.1} parent=31 // pred_check
          %p245 = pneg %p61
        $region34: #{tpu_custom_call.1} parent=31 // pred_check_branch
          %247 = sbr.rel (%p245) target = $region36
        $region35: #{tpu_custom_call.1} parent=31 // pred_region
          %248 = dma.done %s241, 128
        $region36: #{tpu_custom_call.1} parent=31 // pred_fallthru
          _
        // Predicated region
        $region37: #{tpu_custom_call.1} parent=31 // pred_check
          %p249 = pneg %p87
        $region38: #{tpu_custom_call.1} parent=31 // pred_check_branch
          %251 = sbr.rel (%p249) target = $region40
        $region39: #{tpu_custom_call.1} parent=31 // pred_region
          %252 = dma.done [#allocation6], 128
        $region40: #{tpu_custom_call.1} parent=31 // pred_fallthru
          _
        // Predicated region
        $region41: #{tpu_custom_call.1} parent=31 // pred_check
          %p253 = pneg %p113
        $region42: #{tpu_custom_call.1} parent=31 // pred_check_branch
          %255 = sbr.rel (%p253) target = $region44
        $region43: #{tpu_custom_call.1} parent=31 // pred_region
          %256 = dma.done [#allocation6], 128
        $region44: #{tpu_custom_call.1} parent=31 // pred_fallthru
          _
        %s257 = sand.u32 %s48, 1
        %s258 = scalar_lea.sflag [#allocation3], %s257
        %s259 = sand.u32 %s48, 1
        %s260 = smul.addr %s259, 8
        %s261 = scalar_lea.vmem [#allocation2], %s260
        %p262 = pneg %p61
        %p263 = pneg %p58
        %p264 = pneg %p87
        %p265 = pneg %p84
        %p266 = pneg %p113
        %p267 = pneg %p110
        %p268 = pneg %p141
        %p269 = pneg %p138
        %s270 = sand.u32 %s128, 1
        %s271 = scalar_lea.sflag [#allocation4], %s270
        %s272 = sand.u32 %s128, 1
        %s273 = smul.addr %s272, 8
        %s274 = scalar_lea.vmem [#allocation8], %s273
        %p275 = pneg %p169
        %p276 = pneg %p166
        %s277 = sand.u32 %s156, 1
        %s278 = scalar_lea.sflag [#allocation10], %s277
        %s279 = sand.u32 %s156, 1
        %s280 = smul.addr %s279, 8
        %s281 = scalar_lea.vmem [#allocation9], %s280
        %v283 = vld [vmem:[%s244] sm:$0xff]
        %v284 = vmul.f32 %v283, 0.17677669
        %v285 = vpack.c.bf16 %v284, %v284
        %v286 = vld [vmem:[#allocation5] sm:$0xff]
        %v287 = vpack.c.bf16 %v286, %v286
        %v288 = vld [vmem:[#allocation7] sm:$0xff]
        %v289 = vpack.c.bf16 %v288, %v288
        %vm290 = vcmask 261120
        %v292 = vsel %vm290, %v285, 0
        %v295 = vsel %vm290, %v287, 0
        %297 = vmatprep.subr.bf16.mxu0 0
        %298 = vmatpush1.bf16.xpose.msra.mxu0 %v295
        %299 = vmatprep.subr.bf16.mxu0 0
        %300 = vmatpush1.bf16.xpose.msra.mxu0 0
        %301 = vmatprep.subr.bf16.mxu0 0
        %302 = vmatpush1.bf16.xpose.msra.mxu0 0
        %303 = vmatprep.subr.bf16.mxu0 0
        %304 = vmatpush1.bf16.xpose.msra.mxu0 0
        %305 = vmatprep.subr.bf16.mxu0 0
        %306 = vmatpush1.bf16.xpose.msra.mxu0 0
        %307 = vmatprep.subr.bf16.mxu0 0
        %308 = vmatpush1.bf16.xpose.msra.mxu0 0
        %309 = vmatprep.subr.bf16.mxu0 0
        %310 = vmatpush1.bf16.xpose.msra.mxu0 0
        %311 = vmatprep.subr.bf16.mxu0 0
        %312 = vmatpush1.bf16.xpose.msra.mxu0 0
        %313 = vmatprep.subr.bf16.mxu0 0
        %314 = vmatpush1.bf16.xpose.msra.mxu0 0
        %315 = vmatprep.subr.bf16.mxu0 0
        %316 = vmatpush1.bf16.xpose.msra.mxu0 0
        %317 = vmatprep.subr.bf16.mxu0 0
        %318 = vmatpush1.bf16.xpose.msra.mxu0 0
        %319 = vmatprep.subr.bf16.mxu0 0
        %320 = vmatpush1.bf16.xpose.msra.mxu0 0
        %321 = vmatprep.subr.bf16.mxu0 0
        %322 = vmatpush1.bf16.xpose.msra.mxu0 0
        %323 = vmatprep.subr.bf16.mxu0 0
        %324 = vmatpush1.bf16.xpose.msra.mxu0 0
        %325 = vmatprep.subr.bf16.mxu0 0
        %326 = vmatpush1.bf16.xpose.msra.mxu0 0
        %327 = vmatprep.subr.bf16.mxu0 0
        %328 = vmatpush1.bf16.xpose.msra.mxu0 0
        %329 = vmatprep.mubr.bf16.mxu0 0
        %330 = vmatmul.mubr.bf16.gmra.mrb[0].mxu0 %v292
        %v331 = vpop.f32.mrb[0].mxu0
        %v332 = vadd.f32 0.0, %v331
        %v333 = vpop.f32.mrb[0].mxu0
        %v334 = vpop.f32.mrb[0].mxu0
        %v335 = vpop.f32.mrb[0].mxu0
        %336 = vdwg.mxu0
        %vm337 = vcmask 64512
        %v338 = vsel %vm337, %v332, -inf
        %339 = vmax.xlane.f32.xlu0 %v338
        %v340 = vpop.xlane.xlu0 %339
        %v341 = vsub.f32 %v332, %v340
        %v342 = vmul.f32 %v341, 1.442695
        %v343 = vpow.pop %v342
        %v344 = vsel %vm337, %v343, 0.0
        %345 = vadd.xlane.f32.xlu0 %v344
        %v346 = vpop.xlane.xlu0 %345
        %v347 = vpack.c.bf16 %v343, %v343
        %v349 = vsel %vm337, %v347, 0
        %vm351 = vcmask 1043456
        %v353 = vsel %vm351, %v289, 0
        %355 = vmatprep.subr.bf16.mxu0 0
        %356 = vmatpush1.bf16.msra.mxu0 %v353
        %357 = vmatprep.subr.bf16.mxu0 0
        %358 = vmatpush1.bf16.msra.mxu0 0
        %359 = vmatprep.subr.bf16.mxu0 0
        %360 = vmatpush1.bf16.msra.mxu0 0
        %361 = vmatprep.subr.bf16.mxu0 0
        %362 = vmatpush1.bf16.msra.mxu0 0
        %363 = vmatprep.subr.bf16.mxu0 0
        %364 = vmatpush1.bf16.msra.mxu0 0
        %365 = vmatprep.subr.bf16.mxu0 0
        %366 = vmatpush1.bf16.msra.mxu0 0
        %367 = vmatprep.subr.bf16.mxu0 0
        %368 = vmatpush1.bf16.msra.mxu0 0
        %369 = vmatprep.subr.bf16.mxu0 0
        %370 = vmatpush1.bf16.msra.mxu0 0
        %371 = vmatprep.subr.bf16.mxu0 0
        %372 = vmatpush1.bf16.msra.mxu0 0
        %373 = vmatprep.subr.bf16.mxu0 0
        %374 = vmatpush1.bf16.msra.mxu0 0
        %375 = vmatprep.subr.bf16.mxu0 0
        %376 = vmatpush1.bf16.msra.mxu0 0
        %377 = vmatprep.subr.bf16.mxu0 0
        %378 = vmatpush1.bf16.msra.mxu0 0
        %379 = vmatprep.subr.bf16.mxu0 0
        %380 = vmatpush1.bf16.msra.mxu0 0
        %381 = vmatprep.subr.bf16.mxu0 0
        %382 = vmatpush1.bf16.msra.mxu0 0
        %383 = vmatprep.subr.bf16.mxu0 0
        %384 = vmatpush1.bf16.msra.mxu0 0
        %385 = vmatprep.subr.bf16.mxu0 0
        %386 = vmatpush1.bf16.msra.mxu0 0
        %387 = vmatprep.mubr.bf16.mxu0 0
        %388 = vmatmul.mubr.bf16.gmra.mrb[0].mxu0 %v349
        %v389 = vpop.f32.mrb[0].mxu0
        %v390 = vadd.f32 0.0, %v389
        %v391 = vpop.f32.mrb[0].mxu0
        %v392 = vpop.f32.mrb[0].mxu0
        %v393 = vpop.f32.mrb[0].mxu0
        %394 = vdwg.mxu0
        %v395 = vrcp.pop %v346
        %v396 = vmul.f32 1.0, %v395
        %v397 = vmul.f32 %v343, %v396
        %398 = vst.msk [vmem:[%s281] sm:$0xff] %vm337, %v397
        %v399 = vmul.f32 %v390, %v396
        %400 = vst.msk [vmem:[%s274] sm:$0xff] %vm290, %v399
        %s401 = sand.u32 %s128, 1
        %s402 = scalar_lea.sflag [#allocation4], %s401
        %s403 = sand.u32 %s128, 1
        %s404 = smul.addr %s403, 8
        %s405 = scalar_lea.vmem [#allocation8], %s404
        %s406 = sand.u32 %s156, 1
        %s407 = scalar_lea.sflag [#allocation10], %s406
        %s408 = sand.u32 %s156, 1
        %s409 = smul.addr %s408, 8
        %s410 = scalar_lea.vmem [#allocation9], %s409
        // Predicated region
        $region45: #{tpu_custom_call.1} parent=31 // pred_check
          %p411 = pneg %p138
        $region46: #{tpu_custom_call.1} parent=31 // pred_check_branch
          %413 = sbr.rel (%p411) target = $region48
        $region47: #{tpu_custom_call.1} parent=31 // pred_region
          %s415 = ssub.s32 128, 128
          %416 = vsyncadd %s402, %s415
          %s417 = sadd.s32 %s31, %s30
          %s418 = smul.addr %s417, 128
          %s419 = scalar_lea.hbm %s3, %s418
          %s421 = sshll.u32 %s405, 4
          %s422 = int_to_ptr.vmem [resolvable:$true] %s421
          %424 = dma.vmem_to_hbm [thread:$0]  %s422, 128, %s419, %s402
        $region48: #{tpu_custom_call.1} parent=31 // pred_fallthru
          _
        // Predicated region
        $region49: #{tpu_custom_call.1} parent=31 // pred_check
          %p425 = pneg %p166
        $region50: #{tpu_custom_call.1} parent=31 // pred_check_branch
          %427 = sbr.rel (%p425) target = $region52
        $region51: #{tpu_custom_call.1} parent=31 // pred_region
          %s429 = ssub.s32 128, 128
          %430 = vsyncadd %s407, %s429
          %s431 = sadd.s32 %s31, %s30
          %s432 = smul.addr %s431, 128
          %s433 = scalar_lea.hbm %s4, %s432
          %s435 = sshll.u32 %s410, 4
          %s436 = int_to_ptr.vmem [resolvable:$true] %s435
          %438 = dma.vmem_to_hbm [thread:$0]  %s436, 128, %s433, %s407
        $region52: #{tpu_custom_call.1} parent=31 // pred_fallthru
          _
      $region32: #{tpu_custom_call.1} parent=5 // pred_fallthru
        _
      %p439 = scmp.le.s32.totalorder 2, %s21
      // Predicated region
      $region53: #{tpu_custom_call.1} parent=5 // pred_check
        %p440 = pneg %p439
      $region54: #{tpu_custom_call.1} parent=5 // pred_check_branch
        %442 = sbr.rel (%p440) target = $region56
      $region55: #{tpu_custom_call.1} parent=5 // pred_region
        %s443 = ssub.s32 %s21, 2
        // Predicated region
        $region57: #{tpu_custom_call.1} parent=55 // pred_check
          %p444 = pneg %p144
        $region58: #{tpu_custom_call.1} parent=55 // pred_check_branch
          %446 = sbr.rel (%p444) target = $region60
        $region59: #{tpu_custom_call.1} parent=55 // pred_region
          %s447 = sand.u32 %s129, 1
          %s448 = scalar_lea.sflag [#allocation4], %s447
          %s449 = sand.u32 %s129, 1
          %s450 = smul.addr %s449, 8
          %s451 = scalar_lea.vmem [#allocation8], %s450
          %452 = dma.done %s448, 128
        $region60: #{tpu_custom_call.1} parent=55 // pred_fallthru
          _
        // Predicated region
        $region61: #{tpu_custom_call.1} parent=55 // pred_check
          %p453 = pneg %p172
        $region62: #{tpu_custom_call.1} parent=55 // pred_check_branch
          %455 = sbr.rel (%p453) target = $region64
        $region63: #{tpu_custom_call.1} parent=55 // pred_region
          %s456 = sand.u32 %s157, 1
          %s457 = scalar_lea.sflag [#allocation10], %s456
          %s458 = sand.u32 %s157, 1
          %s459 = smul.addr %s458, 8
          %s460 = scalar_lea.vmem [#allocation9], %s459
          %461 = dma.done %s457, 128
        $region64: #{tpu_custom_call.1} parent=55 // pred_fallthru
          _
      $region56: #{tpu_custom_call.1} parent=5 // pred_fallthru
        _
    $region6: #{tpu_custom_call.1} parent=1 // loop_footer
      %s25 = sadd.s32 1, %s21
    $region7: #{tpu_custom_call.1} parent=1 // loop_footer_branch
      %20 = sbr.rel target = $region3
    $region8: #{tpu_custom_call.1} parent=1 // loop_exit
      _
    %462 = vsyncpa [#allocation3], 1
    %s463 = scalar_lea.sflag [#allocation3], 1
    %464 = vsyncpa %s463, 1
    %465 = vsyncpa [#allocation6], 1
    %466 = vsyncpa [#allocation4], 1
    %s467 = scalar_lea.sflag [#allocation4], 1
    %468 = vsyncpa %s467, 1
    %469 = vsyncpa [#allocation10], 1
    %s470 = scalar_lea.sflag [#allocation10], 1
    %471 = vsyncpa %s470, 1

// kernel: tpu_custom_call.1
$region0: #{tpu_custom_call.1}
  #allocation0 [shape = 'u32[]', space=smem, size = 0x4, offset = 0x4, fixed_abs, tag = 'smem constant byte address 0x4 - core index']
  #allocation1 [shape = 'u32[144,128]{1,0:T(1,128)}', space=vmem, size = 0x12000, scoped, tag = 'internal scratch']
  %s0 = inlined_call_operand.hbm [shape: f32[8,8,32], index: 0, kind: input, shape index: {}]
  %s1 = inlined_call_operand.hbm [shape: f32[8,8,32], index: 1, kind: input, shape index: {}]
  %s2 = inlined_call_operand.hbm [shape: f32[8,8,32], index: 2, kind: input, shape index: {}]
  %s3 = inlined_call_operand.hbm [shape: f32[8,8,32], index: 3, kind: output, shape index: {0}]
  %s4 = inlined_call_operand.hbm [shape: f32[8,8,8], index: 4, kind: output, shape index: {1}]
  %5 = xla_tuple %s3, %s4
  %s6 = sld [smem:[#allocation0]]
  $region65: #{tpu_custom_call.1} parent=0
    _
  %s8 = ssub.s32 1, %s6
  %s9 = scalar_select 0, %s8, %s6
  $region1: #{tpu_custom_call.1} parent=0
    #allocation2 [shape = 'u8[8192]{0}', space=vmem, size = 0x2000, scoped, tag = 'input window, operand 0']
    #allocation3 [shape = 's32[2]{0}', space=sflag, size = 0x8, scoped, tag = 'scoped memory for tpu_custom_call.1']
    #allocation4 [shape = 's32[2]{0}', space=sflag, size = 0x8, scoped, tag = 'scoped memory for tpu_custom_call.1']
    #allocation5 [shape = 'u8[8192]{0}', space=vmem, size = 0x2000, scoped, tag = 'input window, operand 1']
    #allocation6 [shape = 's32[2]{0}', space=sflag, size = 0x8, scoped, tag = 'scoped memory for tpu_custom_call.1']
    #allocation7 [shape = 'u8[8192]{0}', space=vmem, size = 0x2000, scoped, tag = 'input window, operand 2']
    #allocation8 [shape = 'u8[8192]{0}', space=vmem, size = 0x2000, scoped, tag = 'output window, operand 0']
    #allocation9 [shape = 'u8[8192]{0}', space=vmem, size = 0x2000, scoped, tag = 'output window, operand 1']
    #allocation10 [shape = 's32[2]{0}', space=sflag, size = 0x8, scoped, tag = 'scoped memory for tpu_custom_call.1']
    %10 = vsyncpa [#allocation3], 0
    %s11 = scalar_lea.sflag [#allocation3], 1
    %12 = vsyncpa %s11, 0
    %13 = vsyncpa [#allocation6], 0
    %s14 = scalar_lea.sflag [#allocation6], 1
    %15 = vsyncpa %s14, 0
    %16 = vsyncpa [#allocation4], 0
    %s17 = scalar_lea.sflag [#allocation4], 1
    %18 = vsyncpa %s17, 0
    %19 = vsyncpa [#allocation10], 0
    %s20 = scalar_lea.sflag [#allocation10], 1
    %21 = vsyncpa %s20, 0
    loop: start=0, step=1, limit=10
    $region2: #{tpu_custom_call.1} parent=1 // loop_pre_header
      _
    $region3: #{tpu_custom_call.1} parent=1 // loop_header
      %s23 = sphi 0, %s27
      %p24 = scmp.ge.s32.totalorder %s23, 10
      %s30 = sphi 0, %s42
      %s31 = sphi 0, %s38
      %s32 = sphi 0, %s30
      %s33 = sphi 0, %s31
      %s34 = sphi 0, %s32
      %s35 = sphi 0, %s33
      %s47 = sphi 0, %s49
      %s50 = sphi 0, %s47
      %s51 = sphi 0, %s50
      %s67 = sphi 0, %s51
      %s73 = sphi 0, %s75
      %s76 = sphi 0, %s73
      %s77 = sphi 0, %s76
      %s93 = sphi 0, %s77
      %s99 = sphi 0, %s101
      %s102 = sphi 0, %s99
      %s103 = sphi 0, %s102
      %s119 = sphi 0, %s103
      %s127 = sphi 0, %s129
      %s130 = sphi 0, %s127
      %s131 = sphi 0, %s130
      %s147 = sphi 0, %s131
      %s155 = sphi 0, %s157
      %s158 = sphi 0, %s155
      %s159 = sphi 0, %s158
      %s175 = sphi 0, %s159
    $region4: #{tpu_custom_call.1} parent=1 // loop_header_branch
      %26 = sbr.rel (%p24) target = $region8
    $region5: #{tpu_custom_call.1} parent=1 // loop_body
      %s28 = ssub.s32 %s23, 1
      %s29 = ssub.s32 %s23, 2
      %s36 = sadd.s32 1, %s31
      %p37 = scmp.ge.s32.totalorder %s36, 1
      %s38 = scalar_select %p37, 0, %s36
      %s39 = sadd.s32 1, %s30
      %s40 = scalar_select %p37, %s39, %s30
      %p41 = scmp.ge.s32.totalorder %s40, 8
      %s42 = scalar_select %p41, 0, %s40
      %s43 = ssub.s32 %s30, %s42
      %s44 = ssub.s32 %s31, %s38
      %s45 = sor.u32 %s43, %s44
      %p46 = scmp.eq.s32.totalorder %s45, 0
      %s48 = sadd.s32 %s47, 1
      %s49 = scalar_select %p46, %s47, %s48
      %p52 = pneg %p46
      %p53 = scmp.eq.s32.totalorder %s23, 7
      %p54 = por %p52, %p53
      %p55 = scmp.ne.s32.totalorder %s47, %s50
      %p56 = scmp.eq.s32.totalorder %s23, 0
      %p57 = por %p55, %p56
      %p58 = scmp.ne.s32.totalorder %s47, %s50
      %p59 = scmp.eq.s32.totalorder %s28, 7
      %p60 = por %p58, %p59
      %p61 = scmp.ne.s32.totalorder %s50, %s51
      %p62 = scmp.eq.s32.totalorder %s28, 0
      %p63 = por %p61, %p62
      %p64 = scmp.ne.s32.totalorder %s50, %s51
      %p65 = scmp.eq.s32.totalorder %s29, 7
      %p66 = por %p64, %p65
      %p68 = scmp.ne.s32.totalorder %s51, %s67
      %p69 = scmp.eq.s32.totalorder %s29, 0
      %p70 = por %p68, %p69
      %s71 = ssub.s32 %s30, %s42
      %p72 = scmp.eq.s32.totalorder %s71, 0
      %s74 = sadd.s32 %s73, 1
      %s75 = scalar_select %p72, %s73, %s74
      %p78 = pneg %p72
      %p79 = scmp.eq.s32.totalorder %s23, 7
      %p80 = por %p78, %p79
      %p81 = scmp.ne.s32.totalorder %s73, %s76
      %p82 = scmp.eq.s32.totalorder %s23, 0
      %p83 = por %p81, %p82
      %p84 = scmp.ne.s32.totalorder %s73, %s76
      %p85 = scmp.eq.s32.totalorder %s28, 7
      %p86 = por %p84, %p85
      %p87 = scmp.ne.s32.totalorder %s76, %s77
      %p88 = scmp.eq.s32.totalorder %s28, 0
      %p89 = por %p87, %p88
      %p90 = scmp.ne.s32.totalorder %s76, %s77
      %p91 = scmp.eq.s32.totalorder %s29, 7
      %p92 = por %p90, %p91
      %p94 = scmp.ne.s32.totalorder %s77, %s93
      %p95 = scmp.eq.s32.totalorder %s29, 0
      %p96 = por %p94, %p95
      %s97 = ssub.s32 %s30, %s42
      %p98 = scmp.eq.s32.totalorder %s97, 0
      %s100 = sadd.s32 %s99, 1
      %s101 = scalar_select %p98, %s99, %s100
      %p104 = pneg %p98
      %p105 = scmp.eq.s32.totalorder %s23, 7
      %p106 = por %p104, %p105
      %p107 = scmp.ne.s32.totalorder %s99, %s102
      %p108 = scmp.eq.s32.totalorder %s23, 0
      %p109 = por %p107, %p108
      %p110 = scmp.ne.s32.totalorder %s99, %s102
      %p111 = scmp.eq.s32.totalorder %s28, 7
      %p112 = por %p110, %p111
      %p113 = scmp.ne.s32.totalorder %s102, %s103
      %p114 = scmp.eq.s32.totalorder %s28, 0
      %p115 = por %p113, %p114
      %p116 = scmp.ne.s32.totalorder %s102, %s103
      %p117 = scmp.eq.s32.totalorder %s29, 7
      %p118 = por %p116, %p117
      %p120 = scmp.ne.s32.totalorder %s103, %s119
      %p121 = scmp.eq.s32.totalorder %s29, 0
      %p122 = por %p120, %p121
      %s123 = ssub.s32 %s30, %s42
      %s124 = ssub.s32 %s31, %s38
      %s125 = sor.u32 %s123, %s124
      %p126 = scmp.eq.s32.totalorder %s125, 0
      %s128 = sadd.s32 %s127, 1
      %s129 = scalar_select %p126, %s127, %s128
      %p132 = pneg %p126
      %p133 = scmp.eq.s32.totalorder %s23, 7
      %p134 = por %p132, %p133
      %p135 = scmp.ne.s32.totalorder %s127, %s130
      %p136 = scmp.eq.s32.totalorder %s23, 0
      %p137 = por %p135, %p136
      %p138 = scmp.ne.s32.totalorder %s127, %s130
      %p139 = scmp.eq.s32.totalorder %s28, 7
      %p140 = por %p138, %p139
      %p141 = scmp.ne.s32.totalorder %s130, %s131
      %p142 = scmp.eq.s32.totalorder %s28, 0
      %p143 = por %p141, %p142
      %p144 = scmp.ne.s32.totalorder %s130, %s131
      %p145 = scmp.eq.s32.totalorder %s29, 7
      %p146 = por %p144, %p145
      %p148 = scmp.ne.s32.totalorder %s131, %s147
      %p149 = scmp.eq.s32.totalorder %s29, 0
      %p150 = por %p148, %p149
      %s151 = ssub.s32 %s30, %s42
      %s152 = ssub.s32 %s31, %s38
      %s153 = sor.u32 %s151, %s152
      %p154 = scmp.eq.s32.totalorder %s153, 0
      %s156 = sadd.s32 %s155, 1
      %s157 = scalar_select %p154, %s155, %s156
      %p160 = pneg %p154
      %p161 = scmp.eq.s32.totalorder %s23, 7
      %p162 = por %p160, %p161
      %p163 = scmp.ne.s32.totalorder %s155, %s158
      %p164 = scmp.eq.s32.totalorder %s23, 0
      %p165 = por %p163, %p164
      %p166 = scmp.ne.s32.totalorder %s155, %s158
      %p167 = scmp.eq.s32.totalorder %s28, 7
      %p168 = por %p166, %p167
      %p169 = scmp.ne.s32.totalorder %s158, %s159
      %p170 = scmp.eq.s32.totalorder %s28, 0
      %p171 = por %p169, %p170
      %p172 = scmp.ne.s32.totalorder %s158, %s159
      %p173 = scmp.eq.s32.totalorder %s29, 7
      %p174 = por %p172, %p173
      %p176 = scmp.ne.s32.totalorder %s159, %s175
      %p177 = scmp.eq.s32.totalorder %s29, 0
      %p178 = por %p176, %p177
      %p179 = scmp.le.s32.totalorder 1, %s23
      %p180 = scmp.lt.s32.totalorder %s23, 9
      %p181 = pnand %p179, %p180
      %p182 = pneg %p181
      // Predicated region
      $region9: #{tpu_custom_call.1} parent=5 // pred_check
        _
      $region10: #{tpu_custom_call.1} parent=5 // pred_check_branch
        %184 = sbr.rel (%p181) target = $region12
      $region11: #{tpu_custom_call.1} parent=5 // pred_region
        %s185 = ssub.s32 %s23, 1
      $region12: #{tpu_custom_call.1} parent=5 // pred_fallthru
        _
      %p186 = scmp.lt.s32.totalorder %s23, 8
      // Predicated region
      $region13: #{tpu_custom_call.1} parent=5 // pred_check
        %p187 = pneg %p186
      $region14: #{tpu_custom_call.1} parent=5 // pred_check_branch
        %189 = sbr.rel (%p187) target = $region16
      $region15: #{tpu_custom_call.1} parent=5 // pred_region
        // Predicated region
        $region17: #{tpu_custom_call.1} parent=15 // pred_check
          %p190 = pneg %p57
        $region18: #{tpu_custom_call.1} parent=15 // pred_check_branch
          %192 = sbr.rel (%p190) target = $region20
        $region19: #{tpu_custom_call.1} parent=15 // pred_region
          %s193 = sand.u32 %s47, 1
          %s194 = scalar_lea.sflag [#allocation3], %s193
          %s195 = sand.u32 %s47, 1
          %s196 = smul.addr %s195, 8
          %s197 = scalar_lea.vmem [#allocation2], %s196
          %s199 = ssub.s32 128, 128
          %200 = vsyncadd %s194, %s199
          %s201 = sadd.s32 %s31, %s30
          %s202 = smul.addr %s201, 128
          %s203 = scalar_lea.hbm %s0, %s202
          %s205 = sshll.u32 %s197, 4
          %s206 = int_to_ptr.vmem [resolvable:$true] %s205
          %208 = dma.hbm_to_vmem [thread:$0]  %s203, 128, %s206, %s194
        $region20: #{tpu_custom_call.1} parent=15 // pred_fallthru
          _
        // Predicated region
        $region21: #{tpu_custom_call.1} parent=15 // pred_check
          %p209 = pneg %p83
        $region22: #{tpu_custom_call.1} parent=15 // pred_check_branch
          %211 = sbr.rel (%p209) target = $region24
        $region23: #{tpu_custom_call.1} parent=15 // pred_region
          %s212 = sand.u32 %s23, 1
          %s213 = scalar_lea.sflag [#allocation6], %s212
          %s214 = sand.u32 %s73, 1
          %s215 = smul.addr %s214, 8
          %s216 = scalar_lea.vmem [#allocation5], %s215
          %s218 = ssub.s32 128, 128
          %219 = vsyncadd %s213, %s218
          %s220 = smul.addr %s30, 128
          %s221 = scalar_lea.hbm %s1, %s220
          %s223 = sshll.u32 %s216, 4
          %s224 = int_to_ptr.vmem [resolvable:$true] %s223
          %226 = dma.hbm_to_vmem [thread:$0]  %s221, 128, %s224, %s213
        $region24: #{tpu_custom_call.1} parent=15 // pred_fallthru
          _
        // Predicated region
        $region25: #{tpu_custom_call.1} parent=15 // pred_check
          %p227 = pneg %p109
        $region26: #{tpu_custom_call.1} parent=15 // pred_check_branch
          %229 = sbr.rel (%p227) target = $region28
        $region27: #{tpu_custom_call.1} parent=15 // pred_region
          %s230 = sand.u32 %s23, 1
          %s231 = scalar_lea.sflag [#allocation6], %s230
          %s232 = sand.u32 %s99, 1
          %s233 = smul.addr %s232, 8
          %s234 = scalar_lea.vmem [#allocation7], %s233
          %s236 = ssub.s32 128, 128
          %237 = vsyncadd %s231, %s236
          %s238 = smul.addr %s30, 128
          %s239 = scalar_lea.hbm %s2, %s238
          %s241 = sshll.u32 %s234, 4
          %s242 = int_to_ptr.vmem [resolvable:$true] %s241
          %244 = dma.hbm_to_vmem [thread:$0]  %s239, 128, %s242, %s231
        $region28: #{tpu_custom_call.1} parent=15 // pred_fallthru
          _
      $region16: #{tpu_custom_call.1} parent=5 // pred_fallthru
        _
      %p245 = scmp.le.s32.totalorder 1, %s23
      %p246 = scmp.lt.s32.totalorder %s23, 9
      %p247 = pnand %p245, %p246
      %p248 = pneg %p247
      // Predicated region
      $region29: #{tpu_custom_call.1} parent=5 // pred_check
        _
      $region30: #{tpu_custom_call.1} parent=5 // pred_check_branch
        %250 = sbr.rel (%p247) target = $region32
      $region31: #{tpu_custom_call.1} parent=5 // pred_region
        %s251 = ssub.s32 %s23, 1
        %s252 = sand.u32 %s50, 1
        %s253 = scalar_lea.sflag [#allocation3], %s252
        %s254 = sand.u32 %s50, 1
        %s255 = smul.addr %s254, 8
        %s256 = scalar_lea.vmem [#allocation2], %s255
        // Predicated region
        $region33: #{tpu_custom_call.1} parent=31 // pred_check
          %p257 = pneg %p63
        $region34: #{tpu_custom_call.1} parent=31 // pred_check_branch
          %259 = sbr.rel (%p257) target = $region36
        $region35: #{tpu_custom_call.1} parent=31 // pred_region
          %260 = dma.done %s253, 128
        $region36: #{tpu_custom_call.1} parent=31 // pred_fallthru
          _
        %s261 = sand.u32 %s28, 1
        %s262 = scalar_lea.sflag [#allocation6], %s261
        %s263 = sand.u32 %s76, 1
        %s264 = smul.addr %s263, 8
        %s265 = scalar_lea.vmem [#allocation5], %s264
        // Predicated region
        $region37: #{tpu_custom_call.1} parent=31 // pred_check
          %p266 = pneg %p89
        $region38: #{tpu_custom_call.1} parent=31 // pred_check_branch
          %268 = sbr.rel (%p266) target = $region40
        $region39: #{tpu_custom_call.1} parent=31 // pred_region
          %269 = dma.done %s262, 128
        $region40: #{tpu_custom_call.1} parent=31 // pred_fallthru
          _
        %s270 = sand.u32 %s28, 1
        %s271 = scalar_lea.sflag [#allocation6], %s270
        %s272 = sand.u32 %s102, 1
        %s273 = smul.addr %s272, 8
        %s274 = scalar_lea.vmem [#allocation7], %s273
        // Predicated region
        $region41: #{tpu_custom_call.1} parent=31 // pred_check
          %p275 = pneg %p115
        $region42: #{tpu_custom_call.1} parent=31 // pred_check_branch
          %277 = sbr.rel (%p275) target = $region44
        $region43: #{tpu_custom_call.1} parent=31 // pred_region
          %278 = dma.done %s271, 128
        $region44: #{tpu_custom_call.1} parent=31 // pred_fallthru
          _
        %s279 = sand.u32 %s50, 1
        %s280 = scalar_lea.sflag [#allocation3], %s279
        %s281 = sand.u32 %s50, 1
        %s282 = smul.addr %s281, 8
        %s283 = scalar_lea.vmem [#allocation2], %s282
        %p284 = pneg %p63
        %p285 = pneg %p60
        %s286 = sand.u32 %s28, 1
        %s287 = scalar_lea.sflag [#allocation6], %s286
        %s288 = sand.u32 %s76, 1
        %s289 = smul.addr %s288, 8
        %s290 = scalar_lea.vmem [#allocation5], %s289
        %p291 = pneg %p89
        %p292 = pneg %p86
        %s293 = sand.u32 %s28, 1
        %s294 = scalar_lea.sflag [#allocation6], %s293
        %s295 = sand.u32 %s102, 1
        %s296 = smul.addr %s295, 8
        %s297 = scalar_lea.vmem [#allocation7], %s296
        %p298 = pneg %p115
        %p299 = pneg %p112
        %p300 = pneg %p143
        %p301 = pneg %p140
        %s302 = sand.u32 %s130, 1
        %s303 = scalar_lea.sflag [#allocation4], %s302
        %s304 = sand.u32 %s130, 1
        %s305 = smul.addr %s304, 8
        %s306 = scalar_lea.vmem [#allocation8], %s305
        %p307 = pneg %p171
        %p308 = pneg %p168
        %s309 = sand.u32 %s158, 1
        %s310 = scalar_lea.sflag [#allocation10], %s309
        %s311 = sand.u32 %s158, 1
        %s312 = smul.addr %s311, 8
        %s313 = scalar_lea.vmem [#allocation9], %s312
        %v315 = vld [vmem:[%s256] sm:$0xff]
        %v316 = vmul.f32 %v315, 0.17677669
        %v317 = vpack.c.bf16 %v316, %v316
        %v318 = vld [vmem:[%s265] sm:$0xff]
        %v319 = vpack.c.bf16 %v318, %v318
        %v320 = vld [vmem:[%s274] sm:$0xff]
        %v321 = vpack.c.bf16 %v320, %v320
        %vm322 = vcmask 261120
        %v324 = vsel %vm322, %v317, 0
        %v327 = vsel %vm322, %v319, 0
        %329 = vmatprep.subr.bf16.mxu0 0
        %330 = vmatpush1.bf16.xpose.msra.mxu0 %v327
        %331 = vmatprep.subr.bf16.mxu0 0
        %332 = vmatpush1.bf16.xpose.msra.mxu0 0
        %333 = vmatprep.subr.bf16.mxu0 0
        %334 = vmatpush1.bf16.xpose.msra.mxu0 0
        %335 = vmatprep.subr.bf16.mxu0 0
        %336 = vmatpush1.bf16.xpose.msra.mxu0 0
        %337 = vmatprep.subr.bf16.mxu0 0
        %338 = vmatpush1.bf16.xpose.msra.mxu0 0
        %339 = vmatprep.subr.bf16.mxu0 0
        %340 = vmatpush1.bf16.xpose.msra.mxu0 0
        %341 = vmatprep.subr.bf16.mxu0 0
        %342 = vmatpush1.bf16.xpose.msra.mxu0 0
        %343 = vmatprep.subr.bf16.mxu0 0
        %344 = vmatpush1.bf16.xpose.msra.mxu0 0
        %345 = vmatprep.subr.bf16.mxu0 0
        %346 = vmatpush1.bf16.xpose.msra.mxu0 0
        %347 = vmatprep.subr.bf16.mxu0 0
        %348 = vmatpush1.bf16.xpose.msra.mxu0 0
        %349 = vmatprep.subr.bf16.mxu0 0
        %350 = vmatpush1.bf16.xpose.msra.mxu0 0
        %351 = vmatprep.subr.bf16.mxu0 0
        %352 = vmatpush1.bf16.xpose.msra.mxu0 0
        %353 = vmatprep.subr.bf16.mxu0 0
        %354 = vmatpush1.bf16.xpose.msra.mxu0 0
        %355 = vmatprep.subr.bf16.mxu0 0
        %356 = vmatpush1.bf16.xpose.msra.mxu0 0
        %357 = vmatprep.subr.bf16.mxu0 0
        %358 = vmatpush1.bf16.xpose.msra.mxu0 0
        %359 = vmatprep.subr.bf16.mxu0 0
        %360 = vmatpush1.bf16.xpose.msra.mxu0 0
        %361 = vmatprep.mubr.bf16.mxu0 0
        %362 = vmatmul.mubr.bf16.gmra.mrb[0].mxu0 %v324
        %v363 = vpop.f32.mrb[0].mxu0
        %v364 = vadd.f32 0.0, %v363
        %v365 = vpop.f32.mrb[0].mxu0
        %v366 = vpop.f32.mrb[0].mxu0
        %v367 = vpop.f32.mrb[0].mxu0
        %368 = vdwg.mxu0
        %vm369 = vcmask 64512
        %v370 = vsel %vm369, %v364, -inf
        %371 = vmax.xlane.f32.xlu0 %v370
        %v372 = vpop.xlane.xlu0 %371
        %v373 = vsub.f32 %v364, %v372
        %v374 = vmul.f32 %v373, 1.442695
        %v375 = vpow.pop %v374
        %v376 = vsel %vm369, %v375, 0.0
        %377 = vadd.xlane.f32.xlu0 %v376
        %v378 = vpop.xlane.xlu0 %377
        %v379 = vpack.c.bf16 %v375, %v375
        %v381 = vsel %vm369, %v379, 0
        %vm383 = vcmask 1043456
        %v385 = vsel %vm383, %v321, 0
        %387 = vmatprep.subr.bf16.mxu0 0
        %388 = vmatpush1.bf16.msra.mxu0 %v385
        %389 = vmatprep.subr.bf16.mxu0 0
        %390 = vmatpush1.bf16.msra.mxu0 0
        %391 = vmatprep.subr.bf16.mxu0 0
        %392 = vmatpush1.bf16.msra.mxu0 0
        %393 = vmatprep.subr.bf16.mxu0 0
        %394 = vmatpush1.bf16.msra.mxu0 0
        %395 = vmatprep.subr.bf16.mxu0 0
        %396 = vmatpush1.bf16.msra.mxu0 0
        %397 = vmatprep.subr.bf16.mxu0 0
        %398 = vmatpush1.bf16.msra.mxu0 0
        %399 = vmatprep.subr.bf16.mxu0 0
        %400 = vmatpush1.bf16.msra.mxu0 0
        %401 = vmatprep.subr.bf16.mxu0 0
        %402 = vmatpush1.bf16.msra.mxu0 0
        %403 = vmatprep.subr.bf16.mxu0 0
        %404 = vmatpush1.bf16.msra.mxu0 0
        %405 = vmatprep.subr.bf16.mxu0 0
        %406 = vmatpush1.bf16.msra.mxu0 0
        %407 = vmatprep.subr.bf16.mxu0 0
        %408 = vmatpush1.bf16.msra.mxu0 0
        %409 = vmatprep.subr.bf16.mxu0 0
        %410 = vmatpush1.bf16.msra.mxu0 0
        %411 = vmatprep.subr.bf16.mxu0 0
        %412 = vmatpush1.bf16.msra.mxu0 0
        %413 = vmatprep.subr.bf16.mxu0 0
        %414 = vmatpush1.bf16.msra.mxu0 0
        %415 = vmatprep.subr.bf16.mxu0 0
        %416 = vmatpush1.bf16.msra.mxu0 0
        %417 = vmatprep.subr.bf16.mxu0 0
        %418 = vmatpush1.bf16.msra.mxu0 0
        %419 = vmatprep.mubr.bf16.mxu0 0
        %420 = vmatmul.mubr.bf16.gmra.mrb[0].mxu0 %v381
        %v421 = vpop.f32.mrb[0].mxu0
        %v422 = vadd.f32 0.0, %v421
        %v423 = vpop.f32.mrb[0].mxu0
        %v424 = vpop.f32.mrb[0].mxu0
        %v425 = vpop.f32.mrb[0].mxu0
        %426 = vdwg.mxu0
        %v427 = vrcp.pop %v378
        %v428 = vmul.f32 1.0, %v427
        %v429 = vmul.f32 %v375, %v428
        %430 = vst.msk [vmem:[%s313] sm:$0xff] %vm369, %v429
        %v431 = vmul.f32 %v422, %v428
        %432 = vst.msk [vmem:[%s306] sm:$0xff] %vm322, %v431
        %s433 = sand.u32 %s130, 1
        %s434 = scalar_lea.sflag [#allocation4], %s433
        %s435 = sand.u32 %s130, 1
        %s436 = smul.addr %s435, 8
        %s437 = scalar_lea.vmem [#allocation8], %s436
        %s438 = sand.u32 %s158, 1
        %s439 = scalar_lea.sflag [#allocation10], %s438
        %s440 = sand.u32 %s158, 1
        %s441 = smul.addr %s440, 8
        %s442 = scalar_lea.vmem [#allocation9], %s441
        // Predicated region
        $region45: #{tpu_custom_call.1} parent=31 // pred_check
          %p443 = pneg %p140
        $region46: #{tpu_custom_call.1} parent=31 // pred_check_branch
          %445 = sbr.rel (%p443) target = $region48
        $region47: #{tpu_custom_call.1} parent=31 // pred_region
          %s447 = ssub.s32 128, 128
          %448 = vsyncadd %s434, %s447
          %s449 = sadd.s32 %s33, %s32
          %s450 = smul.addr %s449, 128
          %s451 = scalar_lea.hbm %s3, %s450
          %s453 = sshll.u32 %s437, 4
          %s454 = int_to_ptr.vmem [resolvable:$true] %s453
          %456 = dma.vmem_to_hbm [thread:$0]  %s454, 128, %s451, %s434
        $region48: #{tpu_custom_call.1} parent=31 // pred_fallthru
          _
        // Predicated region
        $region49: #{tpu_custom_call.1} parent=31 // pred_check
          %p457 = pneg %p168
        $region50: #{tpu_custom_call.1} parent=31 // pred_check_branch
          %459 = sbr.rel (%p457) target = $region52
        $region51: #{tpu_custom_call.1} parent=31 // pred_region
          %s461 = ssub.s32 128, 128
          %462 = vsyncadd %s439, %s461
          %s463 = sadd.s32 %s33, %s32
          %s464 = smul.addr %s463, 128
          %s465 = scalar_lea.hbm %s4, %s464
          %s467 = sshll.u32 %s442, 4
          %s468 = int_to_ptr.vmem [resolvable:$true] %s467
          %470 = dma.vmem_to_hbm [thread:$0]  %s468, 128, %s465, %s439
        $region52: #{tpu_custom_call.1} parent=31 // pred_fallthru
          _
      $region32: #{tpu_custom_call.1} parent=5 // pred_fallthru
        _
      %p471 = scmp.le.s32.totalorder 2, %s23
      // Predicated region
      $region53: #{tpu_custom_call.1} parent=5 // pred_check
        %p472 = pneg %p471
      $region54: #{tpu_custom_call.1} parent=5 // pred_check_branch
        %474 = sbr.rel (%p472) target = $region56
      $region55: #{tpu_custom_call.1} parent=5 // pred_region
        %s475 = ssub.s32 %s23, 2
        // Predicated region
        $region57: #{tpu_custom_call.1} parent=55 // pred_check
          %p476 = pneg %p146
        $region58: #{tpu_custom_call.1} parent=55 // pred_check_branch
          %478 = sbr.rel (%p476) target = $region60
        $region59: #{tpu_custom_call.1} parent=55 // pred_region
          %s479 = sand.u32 %s131, 1
          %s480 = scalar_lea.sflag [#allocation4], %s479
          %s481 = sand.u32 %s131, 1
          %s482 = smul.addr %s481, 8
          %s483 = scalar_lea.vmem [#allocation8], %s482
          %484 = dma.done %s480, 128
        $region60: #{tpu_custom_call.1} parent=55 // pred_fallthru
          _
        // Predicated region
        $region61: #{tpu_custom_call.1} parent=55 // pred_check
          %p485 = pneg %p174
        $region62: #{tpu_custom_call.1} parent=55 // pred_check_branch
          %487 = sbr.rel (%p485) target = $region64
        $region63: #{tpu_custom_call.1} parent=55 // pred_region
          %s488 = sand.u32 %s159, 1
          %s489 = scalar_lea.sflag [#allocation10], %s488
          %s490 = sand.u32 %s159, 1
          %s491 = smul.addr %s490, 8
          %s492 = scalar_lea.vmem [#allocation9], %s491
          %493 = dma.done %s489, 128
        $region64: #{tpu_custom_call.1} parent=55 // pred_fallthru
          _
      $region56: #{tpu_custom_call.1} parent=5 // pred_fallthru
        _
    $region6: #{tpu_custom_call.1} parent=1 // loop_footer
      %s27 = sadd.s32 1, %s23
    $region7: #{tpu_custom_call.1} parent=1 // loop_footer_branch
      %22 = sbr.rel target = $region3
    $region8: #{tpu_custom_call.1} parent=1 // loop_exit
      _
    %494 = vsyncpa [#allocation3], 1
    %s495 = scalar_lea.sflag [#allocation3], 1
    %496 = vsyncpa %s495, 1
    %497 = vsyncpa [#allocation6], 1
    %s498 = scalar_lea.sflag [#allocation6], 1
    %499 = vsyncpa %s498, 1
    %500 = vsyncpa [#allocation4], 1
    %s501 = scalar_lea.sflag [#allocation4], 1
    %502 = vsyncpa %s501, 1
    %503 = vsyncpa [#allocation10], 1
    %s504 = scalar_lea.sflag [#allocation10], 1
    %505 = vsyncpa %s504, 1

</llo_original>
